<compile_context>
chip_gen: v5e
topology: v5e:2x2
jax: 0.10.0
libtpu: 0.0.40
codegen_flags: <defaults>
</compile_context>

<pallas_src>
import jax
import jax.numpy as jnp
from jax.experimental import pallas as pl
from jax.experimental.pallas import tpu as pltpu

# MXU operand dtype.  bf16 halves DMA bytes for the adjacency / weights and
# runs the MXU at full rate on v5e/v6e/v7x; accumulation is always f32.
# Set to jnp.float32 to recover exact f32 numerics.
MXU_DTYPE = jnp.bfloat16


# ----------------------------------------------------------------------------
# Kernel 1 (fused): all GIN layers + soft-attention pooling + Conv1d stage.
# One grid step = one graph; everything stays resident in VMEM/vregs.
# ----------------------------------------------------------------------------
def make_fused_gnn_kernel(num_layers):
    def kernel(*refs):
        x_ref, adj_ref, eps_ref = refs[0], refs[1], refs[2]
        layer_refs = refs[3:3 + 5 * num_layers]
        bc_ref = refs[3 + 5 * num_layers]
        out_ref = refs[-1]

        adj = adj_ref[0].astype(MXU_DTYPE)                      # (N, N)
        feat = x_ref[0]                                         # (N, Fin), f32
        conv_acc = None

        for l in range(num_layers):
            w_ref, b_ref, watt_ref, batt_ref, wcl_ref = layer_refs[5 * l:5 * l + 5]
            eps = eps_ref[l]                                    # scalar from SMEM

            # ---- GIN conv: h = ReLU(((1+eps)*x + A @ x) @ W + b) ----
            agg = jnp.dot(adj, feat.astype(MXU_DTYPE),
                          preferred_element_type=jnp.float32)   # (N, Fprev)
            pre = (1.0 + eps) * feat + agg                      # f32
            h = jnp.dot(pre.astype(MXU_DTYPE), w_ref[...],
                        preferred_element_type=jnp.float32) + b_ref[...]
            feat = jnp.maximum(h, 0.0)                          # ReLU, f32, (N, Fl)
            fb = feat.astype(MXU_DTYPE)

            # ---- Soft attention pooling, emitted pre-transposed ----
            scores = jnp.dot(fb, watt_ref[...],
                             preferred_element_type=jnp.float32) + batt_ref[...]  # (N, K)
            m = jnp.max(scores, axis=0, keepdims=True)
            e = jnp.exp(scores - m)
            att = (e / jnp.sum(e, axis=0, keepdims=True)).astype(MXU_DTYPE)        # (N, K)
            # pooled^T = X^T @ att -> (Fl, K): contract the node axis directly so
            # no transpose of the readout is ever materialized.
            pooled_t = jax.lax.dot_general(
                fb, att, (((0,), (0,)), ((), ())),
                preferred_element_type=jnp.float32)             # (Fl, K)

            # ---- Conv1d(kernel=stride=conv_size) folded per layer:
            #      conv = sum_l Wc[:, off_l:off_l+Fl] @ pooled_t_l + bc
            contrib = jnp.dot(wcl_ref[...], pooled_t.astype(MXU_DTYPE),
                              preferred_element_type=jnp.float32)          # (C, K)
            conv_acc = contrib if conv_acc is None else conv_acc + contrib

        conv = conv_acc + bc_ref[...]                           # (C, K)
        conv = jnp.where(conv > 0.0, conv, 0.01 * conv)         # leaky_relu(0.01)
        out_ref[0] = conv

    return kernel


def fused_gnn_conv(x, adj, params):
    """All GIN layers + pooling + conv stage in ONE pallas_call -> (B, C, K)."""
    B, N, Fin = x.shape
    gin, pool = params["gin"], params["pool"]
    wc, bc = params["head"][0], params["head"][1]
    L = len(gin)
    C = wc.shape[0]
    K = pool[0][0].shape[1]
    n_hidden = [g[0].shape[1] for g in gin]

    eps_all = jnp.concatenate([g[2] for g in gin]).astype(jnp.float32)     # (L,)

    args = [x.astype(jnp.float32), adj.astype(MXU_DTYPE), eps_all]
    in_specs = [
        pl.BlockSpec((1, N, Fin), lambda i: (i, 0, 0)),
        pl.BlockSpec((1, N, N), lambda i: (i, 0, 0)),
        pl.BlockSpec(memory_space=pltpu.MemorySpace.SMEM),                 # eps (L,)
    ]

    off = 0
    for l in range(L):
        w, b, _ = gin[l]
        watt, batt = pool[l]
        h = w.shape[1]
        wcl = wc[:, off:off + h]          # host-side split of the Conv1d weight
        off += h
        args += [w.astype(MXU_DTYPE), b.astype(jnp.float32),
                 watt.astype(MXU_DTYPE), batt.astype(jnp.float32),
                 wcl.astype(MXU_DTYPE)]
        in_specs += [
            pl.BlockSpec(w.shape, lambda i: (0, 0)),
            pl.BlockSpec(b.shape, lambda i: (0, 0)),
            pl.BlockSpec(watt.shape, lambda i: (0, 0)),
            pl.BlockSpec(batt.shape, lambda i: (0, 0)),
            pl.BlockSpec(wcl.shape, lambda i: (0, 0)),
        ]
    args += [bc.astype(jnp.float32)]
    in_specs += [pl.BlockSpec(bc.shape, lambda i: (0, 0))]

    # Advisory cost estimate for XLA scheduling around this custom call.
    flops, trans, f_prev = 0, 0, Fin
    for h in n_hidden:
        flops += (2 * N * N * f_prev + 2 * N * f_prev * h + 2 * N * h * K
                  + 2 * h * N * K + 2 * C * h * K)
        trans += N * K
        f_prev = h
    flops *= B
    trans *= B
    bytes_accessed = sum(int(a.size) * int(a.dtype.itemsize) for a in args) + B * C * K * 4

    return pl.pallas_call(
        make_fused_gnn_kernel(L),
        out_shape=jax.ShapeDtypeStruct((B, C, K), jnp.float32),
        grid=(B,),
        in_specs=in_specs,
        out_specs=pl.BlockSpec((1, C, K), lambda i: (i, 0, 0)),
        compiler_params=pltpu.CompilerParams(dimension_semantics=("parallel",)),
        cost_estimate=pl.CostEstimate(flops=int(flops), transcendentals=int(trans),
                                      bytes_accessed=int(bytes_accessed)),
    )(*args)


# ----------------------------------------------------------------------------
# Kernel 2: fc head over the WHOLE batch in a single grid step.
#   fc1 = leaky_relu(flat @ W1^T + b1); out = sigmoid(fc1 @ W2^T + b2)
# ----------------------------------------------------------------------------
def head_fc_kernel(flat_ref, w1_ref, b1_ref, w2_ref, b2_ref, out_ref):
    x = flat_ref[...].astype(MXU_DTYPE)                                    # (B, C*K)
    fc1 = jnp.dot(x, w1_ref[...], preferred_element_type=jnp.float32) + b1_ref[...]
    fc1 = jnp.where(fc1 > 0.0, fc1, 0.01 * fc1)                            # leaky_relu
    # TODO(synk): Dropout treated as identity (eval semantics).
    fc2 = jnp.dot(fc1.astype(MXU_DTYPE), w2_ref[...],
                  preferred_element_type=jnp.float32) + b2_ref[...]
    out_ref[...] = jax.nn.sigmoid(fc2)                                     # (B, 2)


def head_fc(flat, w1t, b1, w2t, b2):
    B, CK = flat.shape
    H1 = w1t.shape[1]
    args = (flat.astype(jnp.float32), w1t.astype(MXU_DTYPE), b1.astype(jnp.float32),
            w2t.astype(MXU_DTYPE), b2.astype(jnp.float32))
    flops = 2 * B * CK * H1 + 2 * B * H1 * 2
    bytes_accessed = sum(int(a.size) * int(a.dtype.itemsize) for a in args) + B * 2 * 4
    return pl.pallas_call(
        head_fc_kernel,
        out_shape=jax.ShapeDtypeStruct((B, 2), jnp.float32),
        grid=(1,),
        in_specs=[
            pl.BlockSpec((B, CK), lambda i: (0, 0)),
            pl.BlockSpec(w1t.shape, lambda i: (0, 0)),
            pl.BlockSpec(b1.shape, lambda i: (0, 0)),
            pl.BlockSpec(w2t.shape, lambda i: (0, 0)),
            pl.BlockSpec(b2.shape, lambda i: (0, 0)),
        ],
        out_specs=pl.BlockSpec((B, 2), lambda i: (0, 0)),
        compiler_params=pltpu.CompilerParams(dimension_semantics=("arbitrary",)),
        cost_estimate=pl.CostEstimate(flops=int(flops), transcendentals=int(2 * B),
                                      bytes_accessed=int(bytes_accessed)),
    )(*args)


# ----------------------------------------------------------------------------
# Full forward.
# ----------------------------------------------------------------------------
def forward(x, adj, params):
    conv_out = fused_gnn_conv(x, adj, params)        # (B, C, K), leaky_relu'd
    B, C, K = conv_out.shape
    # Channel-major flatten of the contiguous (B, C, K) tensor == PyTorch
    # conv1.view(B, -1); pure metadata reshape in XLA (256 bytes at these shapes).
    flat = conv_out.reshape(B, C * K)
    _, _, w1t, b1, w2t, b2 = params["head"]
    return head_fc(flat, w1t, b1, w2t, b2)           # (B, 2)


def init_params(key, in_feats, n_hidden, activate_nodes, channel):
    conv_size = int(sum(n_hidden))
    n_keys = 4 * len(n_hidden) + 6
    keys = jax.random.split(key, n_keys)
    ki = iter(keys)

    def lin(k, fan_in, fan_out):
        scale = 1.0 / jnp.sqrt(jnp.float32(fan_in))
        return jax.random.normal(k, (fan_in, fan_out), jnp.float32) * scale

    gin, pool = [], []
    prev = in_feats
    for h in n_hidden:
        w = lin(next(ki), prev, h)
        b = jax.random.normal(next(ki), (1, h), jnp.float32) * 0.01
        eps = jnp.full((1,), 0.1, jnp.float32)                 # init_eps=0.1
        gin.append((w, b, eps))
        watt = lin(next(ki), h, activate_nodes)
        batt = jax.random.normal(next(ki), (1, activate_nodes), jnp.float32) * 0.01
        pool.append((watt, batt))
        prev = h

    wc = jax.random.normal(next(ki), (channel, conv_size), jnp.float32) / jnp.sqrt(
        jnp.float32(conv_size))
    bc = jax.random.normal(next(ki), (channel, 1), jnp.float32) * 0.01
    fin1 = channel * activate_nodes
    w1t = jax.random.normal(next(ki), (fin1, 128), jnp.float32) / jnp.sqrt(jnp.float32(fin1))
    b1 = jax.random.normal(next(ki), (1, 128), jnp.float32) * 0.01
    w2t = jax.random.normal(next(ki), (128, 2), jnp.float32) / jnp.sqrt(jnp.float32(128))
    b2 = jax.random.normal(next(ki), (1, 2), jnp.float32) * 0.01

    return {"gin": gin, "pool": pool, "head": (wc, bc, w1t, b1, w2t, b2)}


if __name__ == "__main__":
    # Small synthetic shapes consistent with the module's forward.
    B = 2                # graphs in batch
    N = 16               # nodes per graph (dense padding)
    in_feats = 8
    n_hidden = [32, 32]  # two GIN layers; conv_size = 64
    activate_nodes = 8   # K
    channel = 4

    key = jax.random.PRNGKey(0)
    k_x, k_a, k_p = jax.random.split(key, 3)

    x = jax.random.normal(k_x, (B, N, in_feats), jnp.float32)
    # Random symmetric binary adjacency (exactly representable in bf16).
    a = (jax.random.uniform(k_a, (B, N, N)) < 0.3).astype(jnp.float32)
    adj = jnp.maximum(a, jnp.transpose(a, (0, 2, 1)))

    params = init_params(k_p, in_feats, n_hidden, activate_nodes, channel)

    out = forward(x, adj, params)
    out = jax.block_until_ready(out)
    assert out.shape == (B, 2)
    assert bool(jnp.all(jnp.isfinite(out)))
    print("KERNEL_OK")
</pallas_src>

<mosaic_0001>
module attributes {stable_mosaic.version = 11 : i64} {
  func.func @kernel(%arg0: i32, %arg1: memref<1x16x8xf32, #tpu.memory_space<vmem>>, %arg2: memref<1x16x16xbf16, #tpu.memory_space<vmem>>, %arg3: memref<2xf32, #tpu.memory_space<smem>>, %arg4: memref<8x32xbf16, #tpu.memory_space<vmem>>, %arg5: memref<1x32xf32, #tpu.memory_space<vmem>>, %arg6: memref<32x8xbf16, #tpu.memory_space<vmem>>, %arg7: memref<1x8xf32, #tpu.memory_space<vmem>>, %arg8: memref<4x32xbf16, #tpu.memory_space<vmem>>, %arg9: memref<32x32xbf16, #tpu.memory_space<vmem>>, %arg10: memref<1x32xf32, #tpu.memory_space<vmem>>, %arg11: memref<32x8xbf16, #tpu.memory_space<vmem>>, %arg12: memref<1x8xf32, #tpu.memory_space<vmem>>, %arg13: memref<4x32xbf16, #tpu.memory_space<vmem>>, %arg14: memref<4x1xf32, #tpu.memory_space<vmem>>, %arg15: memref<1x4x8xf32, #tpu.memory_space<vmem>>) attributes {dimension_semantics = [#tpu.dimension_semantics<parallel>], iteration_bounds = array<i64: 2>, scalar_prefetch = 0 : i64, scratch_operands = 0 : i64, tpu.core_type = #tpu.core_type<tc>, window_params = [{transform_indices = @transform_0, window_bounds = array<i64: 1, 16, 8>}, {transform_indices = @transform_1, window_bounds = array<i64: 1, 16, 16>}, {transform_indices = @transform_2, window_bounds = array<i64: 2>}, {pipeline_mode = #tpu.pipeline_mode<synchronous>, transform_indices = @transform_3, window_bounds = array<i64: 8, 32>}, {pipeline_mode = #tpu.pipeline_mode<synchronous>, transform_indices = @transform_4, window_bounds = array<i64: 1, 32>}, {pipeline_mode = #tpu.pipeline_mode<synchronous>, transform_indices = @transform_5, window_bounds = array<i64: 32, 8>}, {pipeline_mode = #tpu.pipeline_mode<synchronous>, transform_indices = @transform_6, window_bounds = array<i64: 1, 8>}, {pipeline_mode = #tpu.pipeline_mode<synchronous>, transform_indices = @transform_7, window_bounds = array<i64: 4, 32>}, {pipeline_mode = #tpu.pipeline_mode<synchronous>, transform_indices = @transform_8, window_bounds = array<i64: 32, 32>}, {pipeline_mode = #tpu.pipeline_mode<synchronous>, transform_indices = @transform_9, window_bounds = array<i64: 1, 32>}, {pipeline_mode = #tpu.pipeline_mode<synchronous>, transform_indices = @transform_10, window_bounds = array<i64: 32, 8>}, {pipeline_mode = #tpu.pipeline_mode<synchronous>, transform_indices = @transform_11, window_bounds = array<i64: 1, 8>}, {pipeline_mode = #tpu.pipeline_mode<synchronous>, transform_indices = @transform_12, window_bounds = array<i64: 4, 32>}, {pipeline_mode = #tpu.pipeline_mode<synchronous>, transform_indices = @transform_13, window_bounds = array<i64: 4, 1>}, {transform_indices = @transform_14, window_bounds = array<i64: 1, 4, 8>}]} {
    %c0 = arith.constant 0 : index
    %c0_0 = arith.constant 0 : index
    %c0_1 = arith.constant 0 : index
    %0 = vector.load %arg2[%c0, %c0_0, %c0_1] : memref<1x16x16xbf16, #tpu.memory_space<vmem>>, vector<1x16x16xbf16>
    %1 = vector.shape_cast %0 : vector<1x16x16xbf16> to vector<16x16xbf16>
    %c0_2 = arith.constant 0 : index
    %c0_3 = arith.constant 0 : index
    %c0_4 = arith.constant 0 : index
    %2 = vector.load %arg1[%c0_2, %c0_3, %c0_4] : memref<1x16x8xf32, #tpu.memory_space<vmem>>, vector<1x16x8xf32>
    %3 = vector.shape_cast %2 : vector<1x16x8xf32> to vector<16x8xf32>
    %c0_5 = arith.constant 0 : index
    %4 = memref.load %arg3[%c0_5] : memref<2xf32, #tpu.memory_space<smem>>
    %5 = arith.truncf %3 : vector<16x8xf32> to vector<16x8xbf16>
    %cst = arith.constant dense<0.000000e+00> : vector<16x8xf32>
    %6 = tpu.matmul %1, %5, %cst {dimension_numbers = #tpu.dot_dimension_numbers<[1], [0], [0], [1], [0, 0, 1, 1], [], []>} : vector<16x16xbf16>, vector<16x8xbf16>, vector<16x8xf32> -> vector<16x8xf32>
    %cst_6 = arith.constant 1.000000e+00 : f32
    %7 = arith.addf %cst_6, %4 : f32
    %8 = vector.broadcast %7 : f32 to vector<16x8xf32>
    %9 = arith.mulf %8, %3 : vector<16x8xf32>
    %10 = arith.addf %9, %6 : vector<16x8xf32>
    %11 = arith.truncf %10 : vector<16x8xf32> to vector<16x8xbf16>
    %c0_7 = arith.constant 0 : index
    %c0_8 = arith.constant 0 : index
    %12 = vector.load %arg4[%c0_7, %c0_8] : memref<8x32xbf16, #tpu.memory_space<vmem>>, vector<8x32xbf16>
    %cst_9 = arith.constant dense<0.000000e+00> : vector<16x32xf32>
    %13 = tpu.matmul %11, %12, %cst_9 {dimension_numbers = #tpu.dot_dimension_numbers<[1], [0], [0], [1], [0, 0, 1, 1], [], []>} : vector<16x8xbf16>, vector<8x32xbf16>, vector<16x32xf32> -> vector<16x32xf32>
    %c0_10 = arith.constant 0 : index
    %c0_11 = arith.constant 0 : index
    %14 = vector.load %arg5[%c0_10, %c0_11] : memref<1x32xf32, #tpu.memory_space<vmem>>, vector<1x32xf32>
    %15 = vector.broadcast %14 : vector<1x32xf32> to vector<16x32xf32>
    %16 = arith.addf %13, %15 : vector<16x32xf32>
    %cst_12 = arith.constant 0.000000e+00 : f32
    %17 = vector.broadcast %cst_12 : f32 to vector<16x32xf32>
    %18 = arith.maximumf %16, %17 : vector<16x32xf32>
    %19 = arith.truncf %18 : vector<16x32xf32> to vector<16x32xbf16>
    %c0_13 = arith.constant 0 : index
    %c0_14 = arith.constant 0 : index
    %20 = vector.load %arg6[%c0_13, %c0_14] : memref<32x8xbf16, #tpu.memory_space<vmem>>, vector<32x8xbf16>
    %cst_15 = arith.constant dense<0.000000e+00> : vector<16x8xf32>
    %21 = tpu.matmul %19, %20, %cst_15 {dimension_numbers = #tpu.dot_dimension_numbers<[1], [0], [0], [1], [0, 0, 1, 1], [], []>} : vector<16x32xbf16>, vector<32x8xbf16>, vector<16x8xf32> -> vector<16x8xf32>
    %c0_16 = arith.constant 0 : index
    %c0_17 = arith.constant 0 : index
    %22 = vector.load %arg7[%c0_16, %c0_17] : memref<1x8xf32, #tpu.memory_space<vmem>>, vector<1x8xf32>
    %23 = vector.broadcast %22 : vector<1x8xf32> to vector<16x8xf32>
    %24 = arith.addf %21, %23 : vector<16x8xf32>
    %cst_18 = arith.constant dense<0xFF800000> : vector<8xf32>
    %25 = vector.multi_reduction <maximumf>, %24, %cst_18 [0] : vector<16x8xf32> to vector<8xf32>
    %26 = vector.shape_cast %25 : vector<8xf32> to vector<1x8xf32>
    %27 = vector.broadcast %26 : vector<1x8xf32> to vector<16x8xf32>
    %28 = arith.subf %24, %27 : vector<16x8xf32>
    %29 = math.exp %28 : vector<16x8xf32>
    %cst_19 = arith.constant dense<0.000000e+00> : vector<8xf32>
    %30 = vector.multi_reduction <add>, %29, %cst_19 [0] : vector<16x8xf32> to vector<8xf32>
    %31 = vector.shape_cast %30 : vector<8xf32> to vector<1x8xf32>
    %32 = vector.broadcast %31 : vector<1x8xf32> to vector<16x8xf32>
    %33 = arith.divf %29, %32 : vector<16x8xf32>
    %34 = arith.truncf %33 : vector<16x8xf32> to vector<16x8xbf16>
    %cst_20 = arith.constant dense<0.000000e+00> : vector<32x8xf32>
    %35 = tpu.matmul %19, %34, %cst_20 {dimension_numbers = #tpu.dot_dimension_numbers<[0], [0], [1], [1], [0, 1, 1, 1], [], []>} : vector<16x32xbf16>, vector<16x8xbf16>, vector<32x8xf32> -> vector<32x8xf32>
    %c0_21 = arith.constant 0 : index
    %c0_22 = arith.constant 0 : index
    %36 = vector.load %arg8[%c0_21, %c0_22] : memref<4x32xbf16, #tpu.memory_space<vmem>>, vector<4x32xbf16>
    %37 = arith.truncf %35 : vector<32x8xf32> to vector<32x8xbf16>
    %cst_23 = arith.constant dense<0.000000e+00> : vector<4x8xf32>
    %38 = tpu.matmul %36, %37, %cst_23 {dimension_numbers = #tpu.dot_dimension_numbers<[1], [0], [0], [1], [0, 0, 1, 1], [], []>} : vector<4x32xbf16>, vector<32x8xbf16>, vector<4x8xf32> -> vector<4x8xf32>
    %c1 = arith.constant 1 : index
    %39 = memref.load %arg3[%c1] : memref<2xf32, #tpu.memory_space<smem>>
    %40 = arith.truncf %18 : vector<16x32xf32> to vector<16x32xbf16>
    %cst_24 = arith.constant dense<0.000000e+00> : vector<16x32xf32>
    %41 = tpu.matmul %1, %40, %cst_24 {dimension_numbers = #tpu.dot_dimension_numbers<[1], [0], [0], [1], [0, 0, 1, 1], [], []>} : vector<16x16xbf16>, vector<16x32xbf16>, vector<16x32xf32> -> vector<16x32xf32>
    %cst_25 = arith.constant 1.000000e+00 : f32
    %42 = arith.addf %cst_25, %39 : f32
    %43 = vector.broadcast %42 : f32 to vector<16x32xf32>
    %44 = arith.mulf %43, %18 : vector<16x32xf32>
    %45 = arith.addf %44, %41 : vector<16x32xf32>
    %46 = arith.truncf %45 : vector<16x32xf32> to vector<16x32xbf16>
    %c0_26 = arith.constant 0 : index
    %c0_27 = arith.constant 0 : index
    %47 = vector.load %arg9[%c0_26, %c0_27] : memref<32x32xbf16, #tpu.memory_space<vmem>>, vector<32x32xbf16>
    %cst_28 = arith.constant dense<0.000000e+00> : vector<16x32xf32>
    %48 = tpu.matmul %46, %47, %cst_28 {dimension_numbers = #tpu.dot_dimension_numbers<[1], [0], [0], [1], [0, 0, 1, 1], [], []>} : vector<16x32xbf16>, vector<32x32xbf16>, vector<16x32xf32> -> vector<16x32xf32>
    %c0_29 = arith.constant 0 : index
    %c0_30 = arith.constant 0 : index
    %49 = vector.load %arg10[%c0_29, %c0_30] : memref<1x32xf32, #tpu.memory_space<vmem>>, vector<1x32xf32>
    %50 = vector.broadcast %49 : vector<1x32xf32> to vector<16x32xf32>
    %51 = arith.addf %48, %50 : vector<16x32xf32>
    %cst_31 = arith.constant 0.000000e+00 : f32
    %52 = vector.broadcast %cst_31 : f32 to vector<16x32xf32>
    %53 = arith.maximumf %51, %52 : vector<16x32xf32>
    %54 = arith.truncf %53 : vector<16x32xf32> to vector<16x32xbf16>
    %c0_32 = arith.constant 0 : index
    %c0_33 = arith.constant 0 : index
    %55 = vector.load %arg11[%c0_32, %c0_33] : memref<32x8xbf16, #tpu.memory_space<vmem>>, vector<32x8xbf16>
    %cst_34 = arith.constant dense<0.000000e+00> : vector<16x8xf32>
    %56 = tpu.matmul %54, %55, %cst_34 {dimension_numbers = #tpu.dot_dimension_numbers<[1], [0], [0], [1], [0, 0, 1, 1], [], []>} : vector<16x32xbf16>, vector<32x8xbf16>, vector<16x8xf32> -> vector<16x8xf32>
    %c0_35 = arith.constant 0 : index
    %c0_36 = arith.constant 0 : index
    %57 = vector.load %arg12[%c0_35, %c0_36] : memref<1x8xf32, #tpu.memory_space<vmem>>, vector<1x8xf32>
    %58 = vector.broadcast %57 : vector<1x8xf32> to vector<16x8xf32>
    %59 = arith.addf %56, %58 : vector<16x8xf32>
    %cst_37 = arith.constant dense<0xFF800000> : vector<8xf32>
    %60 = vector.multi_reduction <maximumf>, %59, %cst_37 [0] : vector<16x8xf32> to vector<8xf32>
    %61 = vector.shape_cast %60 : vector<8xf32> to vector<1x8xf32>
    %62 = vector.broadcast %61 : vector<1x8xf32> to vector<16x8xf32>
    %63 = arith.subf %59, %62 : vector<16x8xf32>
    %64 = math.exp %63 : vector<16x8xf32>
    %cst_38 = arith.constant dense<0.000000e+00> : vector<8xf32>
    %65 = vector.multi_reduction <add>, %64, %cst_38 [0] : vector<16x8xf32> to vector<8xf32>
    %66 = vector.shape_cast %65 : vector<8xf32> to vector<1x8xf32>
    %67 = vector.broadcast %66 : vector<1x8xf32> to vector<16x8xf32>
    %68 = arith.divf %64, %67 : vector<16x8xf32>
    %69 = arith.truncf %68 : vector<16x8xf32> to vector<16x8xbf16>
    %cst_39 = arith.constant dense<0.000000e+00> : vector<32x8xf32>
    %70 = tpu.matmul %54, %69, %cst_39 {dimension_numbers = #tpu.dot_dimension_numbers<[0], [0], [1], [1], [0, 1, 1, 1], [], []>} : vector<16x32xbf16>, vector<16x8xbf16>, vector<32x8xf32> -> vector<32x8xf32>
    %c0_40 = arith.constant 0 : index
    %c0_41 = arith.constant 0 : index
    %71 = vector.load %arg13[%c0_40, %c0_41] : memref<4x32xbf16, #tpu.memory_space<vmem>>, vector<4x32xbf16>
    %72 = arith.truncf %70 : vector<32x8xf32> to vector<32x8xbf16>
    %cst_42 = arith.constant dense<0.000000e+00> : vector<4x8xf32>
    %73 = tpu.matmul %71, %72, %cst_42 {dimension_numbers = #tpu.dot_dimension_numbers<[1], [0], [0], [1], [0, 0, 1, 1], [], []>} : vector<4x32xbf16>, vector<32x8xbf16>, vector<4x8xf32> -> vector<4x8xf32>
    %74 = arith.addf %38, %73 : vector<4x8xf32>
    %c0_43 = arith.constant 0 : index
    %c0_44 = arith.constant 0 : index
    %75 = vector.load %arg14[%c0_43, %c0_44] : memref<4x1xf32, #tpu.memory_space<vmem>>, vector<4x1xf32>
    %76 = vector.broadcast %75 : vector<4x1xf32> to vector<4x8xf32>
    %77 = arith.addf %74, %76 : vector<4x8xf32>
    %cst_45 = arith.constant 0.000000e+00 : f32
    %78 = vector.broadcast %cst_45 : f32 to vector<4x8xf32>
    %79 = arith.cmpf ogt, %77, %78 : vector<4x8xf32>
    %cst_46 = arith.constant 0.00999999977 : f32
    %80 = vector.broadcast %cst_46 : f32 to vector<4x8xf32>
    %81 = arith.mulf %80, %77 : vector<4x8xf32>
    %82 = arith.select %79, %77, %81 : vector<4x8xi1>, vector<4x8xf32>
    %c0_47 = arith.constant 0 : index
    %c0_48 = arith.constant 0 : index
    %c0_49 = arith.constant 0 : index
    %83 = vector.load %arg15[%c0_47, %c0_48, %c0_49] : memref<1x4x8xf32, #tpu.memory_space<vmem>>, vector<1x4x8xf32>
    %84 = vector.shape_cast %83 : vector<1x4x8xf32> to vector<4x8xf32>
    %85 = vector.shape_cast %82 : vector<4x8xf32> to vector<1x4x8xf32>
    tpu.vector_store %arg15[%c0_47, %c0_48, %c0_49], %85 {strides = array<i32>} : memref<1x4x8xf32, #tpu.memory_space<vmem>>, vector<1x4x8xf32>,
    return
  }
  func.func @transform_0(%arg0: i32) -> (i32, i32, i32) {
    %c0_i32 = arith.constant 0 : i32
    %c0_i32_0 = arith.constant 0 : i32
    %c0_i32_1 = arith.constant 0 : i32
    return %arg0, %c0_i32, %c0_i32_0 : i32, i32, i32
  }
  func.func @transform_1(%arg0: i32) -> (i32, i32, i32) {
    %c0_i32 = arith.constant 0 : i32
    %c0_i32_0 = arith.constant 0 : i32
    %c0_i32_1 = arith.constant 0 : i32
    return %arg0, %c0_i32, %c0_i32_0 : i32, i32, i32
  }
  func.func @transform_2(%arg0: i32) -> i32 {
    %c0_i32 = arith.constant 0 : i32
    %c0_i32_0 = arith.constant 0 : i32
    return %c0_i32 : i32
  }
  func.func @transform_3(%arg0: i32) -> (i32, i32) {
    %c0_i32 = arith.constant 0 : i32
    %c0_i32_0 = arith.constant 0 : i32
    %c0_i32_1 = arith.constant 0 : i32
    return %c0_i32, %c0_i32_0 : i32, i32
  }
  func.func @transform_4(%arg0: i32) -> (i32, i32) {
    %c0_i32 = arith.constant 0 : i32
    %c0_i32_0 = arith.constant 0 : i32
    %c0_i32_1 = arith.constant 0 : i32
    return %c0_i32, %c0_i32_0 : i32, i32
  }
  func.func @transform_5(%arg0: i32) -> (i32, i32) {
    %c0_i32 = arith.constant 0 : i32
    %c0_i32_0 = arith.constant 0 : i32
    %c0_i32_1 = arith.constant 0 : i32
    return %c0_i32, %c0_i32_0 : i32, i32
  }
  func.func @transform_6(%arg0: i32) -> (i32, i32) {
    %c0_i32 = arith.constant 0 : i32
    %c0_i32_0 = arith.constant 0 : i32
    %c0_i32_1 = arith.constant 0 : i32
    return %c0_i32, %c0_i32_0 : i32, i32
  }
  func.func @transform_7(%arg0: i32) -> (i32, i32) {
    %c0_i32 = arith.constant 0 : i32
    %c0_i32_0 = arith.constant 0 : i32
    %c0_i32_1 = arith.constant 0 : i32
    return %c0_i32, %c0_i32_0 : i32, i32
  }
  func.func @transform_8(%arg0: i32) -> (i32, i32) {
    %c0_i32 = arith.constant 0 : i32
    %c0_i32_0 = arith.constant 0 : i32
    %c0_i32_1 = arith.constant 0 : i32
    return %c0_i32, %c0_i32_0 : i32, i32
  }
  func.func @transform_9(%arg0: i32) -> (i32, i32) {
    %c0_i32 = arith.constant 0 : i32
    %c0_i32_0 = arith.constant 0 : i32
    %c0_i32_1 = arith.constant 0 : i32
    return %c0_i32, %c0_i32_0 : i32, i32
  }
  func.func @transform_10(%arg0: i32) -> (i32, i32) {
    %c0_i32 = arith.constant 0 : i32
    %c0_i32_0 = arith.constant 0 : i32
    %c0_i32_1 = arith.constant 0 : i32
    return %c0_i32, %c0_i32_0 : i32, i32
  }
  func.func @transform_11(%arg0: i32) -> (i32, i32) {
    %c0_i32 = arith.constant 0 : i32
    %c0_i32_0 = arith.constant 0 : i32
    %c0_i32_1 = arith.constant 0 : i32
    return %c0_i32, %c0_i32_0 : i32, i32
  }
  func.func @transform_12(%arg0: i32) -> (i32, i32) {
    %c0_i32 = arith.constant 0 : i32
    %c0_i32_0 = arith.constant 0 : i32
    %c0_i32_1 = arith.constant 0 : i32
    return %c0_i32, %c0_i32_0 : i32, i32
  }
  func.func @transform_13(%arg0: i32) -> (i32, i32) {
    %c0_i32 = arith.constant 0 : i32
    %c0_i32_0 = arith.constant 0 : i32
    %c0_i32_1 = arith.constant 0 : i32
    return %c0_i32, %c0_i32_0 : i32, i32
  }
  func.func @transform_14(%arg0: i32) -> (i32, i32, i32) {
    %c0_i32 = arith.constant 0 : i32
    %c0_i32_0 = arith.constant 0 : i32
    %c0_i32_1 = arith.constant 0 : i32
    return %arg0, %c0_i32, %c0_i32_0 : i32, i32, i32
  }
}

</mosaic_0001>

<llo_original>
// kernel: tpu_custom_call.1
$region0: #{tpu_custom_call.1}
  #allocation0 [shape = 'u32[]', space=smem, size = 0x4, offset = 0x4, fixed_abs, tag = 'smem constant byte address 0x4 - core index']
  #allocation1 [shape = 'u32[72,128]{1,0:T(1,128)}', space=vmem, size = 0x9000, scoped, tag = 'internal scratch']
  %s0 = inlined_call_operand.vmem [shape: f32[2,16,8], index: 0, kind: input, shape index: {}]
  %s1 = inlined_call_operand.vmem [shape: bf16[2,16,16], index: 1, kind: input, shape index: {}]
  %s2 = inlined_call_operand.vmem [shape: f32[2], index: 2, kind: input, shape index: {}]
  %s3 = inlined_call_operand.vmem [shape: bf16[8,32], index: 3, kind: input, shape index: {}]
  %s4 = inlined_call_operand.vmem [shape: f32[1,32], index: 4, kind: input, shape index: {}]
  %s5 = inlined_call_operand.vmem [shape: bf16[32,8], index: 5, kind: input, shape index: {}]
  %s6 = inlined_call_operand.vmem [shape: f32[1,8], index: 6, kind: input, shape index: {}]
  %s7 = inlined_call_operand.vmem [shape: bf16[4,32], index: 7, kind: input, shape index: {}]
  %s8 = inlined_call_operand.vmem [shape: bf16[32,32], index: 8, kind: input, shape index: {}]
  %s9 = inlined_call_operand.vmem [shape: f32[1,32], index: 9, kind: input, shape index: {}]
  %s10 = inlined_call_operand.vmem [shape: bf16[32,8], index: 10, kind: input, shape index: {}]
  %s11 = inlined_call_operand.vmem [shape: f32[1,8], index: 11, kind: input, shape index: {}]
  %s12 = inlined_call_operand.vmem [shape: bf16[4,32], index: 12, kind: input, shape index: {}]
  %s13 = inlined_call_operand.vmem [shape: f32[4,1], index: 13, kind: input, shape index: {}]
  %s14 = inlined_call_operand.hbm [shape: f32[2,4,8], index: 14, kind: output, shape index: {}]
  %s15 = sld [smem:[#allocation0]]
  $region93: #{tpu_custom_call.1} parent=0
    _
  %s17 = ssub.s32 1, %s15
  %s18 = scalar_select 0, %s17, %s15
  $region1: #{tpu_custom_call.1} parent=0
    #allocation2 [shape = 'u8[512]{0}', space=smem, size = 0x200, scoped, tag = 'input window, operand 2, single buffered']
    #allocation3 [shape = 's32[2]{0}', space=sflag, size = 0x8, scoped, tag = 'scoped memory for tpu_custom_call.1']
    #allocation4 [shape = 's32[2]{0}', space=sflag, size = 0x8, scoped, tag = 'scoped memory for tpu_custom_call.1']
    #allocation5 [shape = 'u8[4096]{0}', space=vmem, size = 0x1000, scoped, tag = 'output window, operand 0']
    %19 = vsyncpa [#allocation4], 0
    %20 = vsyncpa [#allocation3], 0
    %s21 = scalar_lea.sflag [#allocation3], 1
    %22 = vsyncpa %s21, 0
    loop: start=0, step=1, limit=4
    $region2: #{tpu_custom_call.1} parent=1 // loop_pre_header
      _
    $region3: #{tpu_custom_call.1} parent=1 // loop_header
      %s24 = sphi 0, %s28
      %p25 = scmp.ge.s32.totalorder %s24, 4
      %s34 = sphi 0, %s36
      %s37 = sphi 0, %s34
      %s38 = sphi 0, %s37
      %s54 = sphi 0, %s38
      %s60 = sphi 0, %s62
      %s63 = sphi 0, %s60
      %s64 = sphi 0, %s63
      %s80 = sphi 0, %s64
      %s84 = sphi 0, %s84
      %s86 = sphi 0, %s84
      %s87 = sphi 0, %s86
      %s101 = sphi 0, %s87
      %s105 = sphi 0, %s105
      %s107 = sphi 0, %s105
      %s108 = sphi 0, %s107
      %s122 = sphi 0, %s108
      %s126 = sphi 0, %s126
      %s128 = sphi 0, %s126
      %s129 = sphi 0, %s128
      %s143 = sphi 0, %s129
      %s147 = sphi 0, %s147
      %s149 = sphi 0, %s147
      %s150 = sphi 0, %s149
      %s164 = sphi 0, %s150
      %s168 = sphi 0, %s168
      %s170 = sphi 0, %s168
      %s171 = sphi 0, %s170
      %s185 = sphi 0, %s171
      %s189 = sphi 0, %s189
      %s191 = sphi 0, %s189
      %s192 = sphi 0, %s191
      %s206 = sphi 0, %s192
      %s210 = sphi 0, %s210
      %s212 = sphi 0, %s210
      %s213 = sphi 0, %s212
      %s227 = sphi 0, %s213
      %s231 = sphi 0, %s231
      %s233 = sphi 0, %s231
      %s234 = sphi 0, %s233
      %s248 = sphi 0, %s234
      %s252 = sphi 0, %s252
      %s254 = sphi 0, %s252
      %s255 = sphi 0, %s254
      %s269 = sphi 0, %s255
      %s273 = sphi 0, %s273
      %s275 = sphi 0, %s273
      %s276 = sphi 0, %s275
      %s290 = sphi 0, %s276
      %s294 = sphi 0, %s294
      %s296 = sphi 0, %s294
      %s297 = sphi 0, %s296
      %s311 = sphi 0, %s297
      %s315 = sphi 0, %s315
      %s317 = sphi 0, %s315
      %s318 = sphi 0, %s317
      %s332 = sphi 0, %s318
      %s338 = sphi 0, %s340
      %s341 = sphi 0, %s338
      %s342 = sphi 0, %s341
      %s358 = sphi 0, %s342
    $region4: #{tpu_custom_call.1} parent=1 // loop_header_branch
      %27 = sbr.rel (%p25) target = $region8
    $region5: #{tpu_custom_call.1} parent=1 // loop_body
      %s29 = ssub.s32 %s24, 1
      %s30 = ssub.s32 %s24, 2
      %s31 = sadd.s32 %s24, 1
      %s32 = ssub.s32 %s24, %s31
      %p33 = scmp.eq.s32.totalorder %s32, 0
      %s35 = sadd.s32 %s34, 1
      %s36 = scalar_select %p33, %s34, %s35
      %p39 = pneg %p33
      %p40 = scmp.eq.s32.totalorder %s24, 1
      %p41 = por %p39, %p40
      %p42 = scmp.ne.s32.totalorder %s34, %s37
      %p43 = scmp.eq.s32.totalorder %s24, 0
      %p44 = por %p42, %p43
      %p45 = scmp.ne.s32.totalorder %s34, %s37
      %p46 = scmp.eq.s32.totalorder %s29, 1
      %p47 = por %p45, %p46
      %p48 = scmp.ne.s32.totalorder %s37, %s38
      %p49 = scmp.eq.s32.totalorder %s29, 0
      %p50 = por %p48, %p49
      %p51 = scmp.ne.s32.totalorder %s37, %s38
      %p52 = scmp.eq.s32.totalorder %s30, 1
      %p53 = por %p51, %p52
      %p55 = scmp.ne.s32.totalorder %s38, %s54
      %p56 = scmp.eq.s32.totalorder %s30, 0
      %p57 = por %p55, %p56
      %s58 = ssub.s32 %s24, %s31
      %p59 = scmp.eq.s32.totalorder %s58, 0
      %s61 = sadd.s32 %s60, 1
      %s62 = scalar_select %p59, %s60, %s61
      %p65 = pneg %p59
      %p66 = scmp.eq.s32.totalorder %s24, 1
      %p67 = por %p65, %p66
      %p68 = scmp.ne.s32.totalorder %s60, %s63
      %p69 = scmp.eq.s32.totalorder %s24, 0
      %p70 = por %p68, %p69
      %p71 = scmp.ne.s32.totalorder %s60, %s63
      %p72 = scmp.eq.s32.totalorder %s29, 1
      %p73 = por %p71, %p72
      %p74 = scmp.ne.s32.totalorder %s63, %s64
      %p75 = scmp.eq.s32.totalorder %s29, 0
      %p76 = por %p74, %p75
      %p77 = scmp.ne.s32.totalorder %s63, %s64
      %p78 = scmp.eq.s32.totalorder %s30, 1
      %p79 = por %p77, %p78
      %p81 = scmp.ne.s32.totalorder %s64, %s80
      %p82 = scmp.eq.s32.totalorder %s30, 0
      %p83 = por %p81, %p82
      %s85 = sadd.s32 %s84, 1
      %p88 = scmp.eq.s32.totalorder %s24, 1
      %p89 = scmp.ne.s32.totalorder %s84, %s86
      %p90 = scmp.eq.s32.totalorder %s24, 0
      %p91 = por %p89, %p90
      %p92 = scmp.ne.s32.totalorder %s84, %s86
      %p93 = scmp.eq.s32.totalorder %s29, 1
      %p94 = por %p92, %p93
      %p95 = scmp.ne.s32.totalorder %s86, %s87
      %p96 = scmp.eq.s32.totalorder %s29, 0
      %p97 = por %p95, %p96
      %p98 = scmp.ne.s32.totalorder %s86, %s87
      %p99 = scmp.eq.s32.totalorder %s30, 1
      %p100 = por %p98, %p99
      %p102 = scmp.ne.s32.totalorder %s87, %s101
      %p103 = scmp.eq.s32.totalorder %s30, 0
      %p104 = por %p102, %p103
      %s106 = sadd.s32 %s105, 1
      %p109 = scmp.eq.s32.totalorder %s24, 1
      %p110 = scmp.ne.s32.totalorder %s105, %s107
      %p111 = scmp.eq.s32.totalorder %s24, 0
      %p112 = por %p110, %p111
      %p113 = scmp.ne.s32.totalorder %s105, %s107
      %p114 = scmp.eq.s32.totalorder %s29, 1
      %p115 = por %p113, %p114
      %p116 = scmp.ne.s32.totalorder %s107, %s108
      %p117 = scmp.eq.s32.totalorder %s29, 0
      %p118 = por %p116, %p117
      %p119 = scmp.ne.s32.totalorder %s107, %s108
      %p120 = scmp.eq.s32.totalorder %s30, 1
      %p121 = por %p119, %p120
      %p123 = scmp.ne.s32.totalorder %s108, %s122
      %p124 = scmp.eq.s32.totalorder %s30, 0
      %p125 = por %p123, %p124
      %s127 = sadd.s32 %s126, 1
      %p130 = scmp.eq.s32.totalorder %s24, 1
      %p131 = scmp.ne.s32.totalorder %s126, %s128
      %p132 = scmp.eq.s32.totalorder %s24, 0
      %p133 = por %p131, %p132
      %p134 = scmp.ne.s32.totalorder %s126, %s128
      %p135 = scmp.eq.s32.totalorder %s29, 1
      %p136 = por %p134, %p135
      %p137 = scmp.ne.s32.totalorder %s128, %s129
      %p138 = scmp.eq.s32.totalorder %s29, 0
      %p139 = por %p137, %p138
      %p140 = scmp.ne.s32.totalorder %s128, %s129
      %p141 = scmp.eq.s32.totalorder %s30, 1
      %p142 = por %p140, %p141
      %p144 = scmp.ne.s32.totalorder %s129, %s143
      %p145 = scmp.eq.s32.totalorder %s30, 0
      %p146 = por %p144, %p145
      %s148 = sadd.s32 %s147, 1
      %p151 = scmp.eq.s32.totalorder %s24, 1
      %p152 = scmp.ne.s32.totalorder %s147, %s149
      %p153 = scmp.eq.s32.totalorder %s24, 0
      %p154 = por %p152, %p153
      %p155 = scmp.ne.s32.totalorder %s147, %s149
      %p156 = scmp.eq.s32.totalorder %s29, 1
      %p157 = por %p155, %p156
      %p158 = scmp.ne.s32.totalorder %s149, %s150
      %p159 = scmp.eq.s32.totalorder %s29, 0
      %p160 = por %p158, %p159
      %p161 = scmp.ne.s32.totalorder %s149, %s150
      %p162 = scmp.eq.s32.totalorder %s30, 1
      %p163 = por %p161, %p162
      %p165 = scmp.ne.s32.totalorder %s150, %s164
      %p166 = scmp.eq.s32.totalorder %s30, 0
      %p167 = por %p165, %p166
      %s169 = sadd.s32 %s168, 1
      %p172 = scmp.eq.s32.totalorder %s24, 1
      %p173 = scmp.ne.s32.totalorder %s168, %s170
      %p174 = scmp.eq.s32.totalorder %s24, 0
      %p175 = por %p173, %p174
      %p176 = scmp.ne.s32.totalorder %s168, %s170
      %p177 = scmp.eq.s32.totalorder %s29, 1
      %p178 = por %p176, %p177
      %p179 = scmp.ne.s32.totalorder %s170, %s171
      %p180 = scmp.eq.s32.totalorder %s29, 0
      %p181 = por %p179, %p180
      %p182 = scmp.ne.s32.totalorder %s170, %s171
      %p183 = scmp.eq.s32.totalorder %s30, 1
      %p184 = por %p182, %p183
      %p186 = scmp.ne.s32.totalorder %s171, %s185
      %p187 = scmp.eq.s32.totalorder %s30, 0
      %p188 = por %p186, %p187
      %s190 = sadd.s32 %s189, 1
      %p193 = scmp.eq.s32.totalorder %s24, 1
      %p194 = scmp.ne.s32.totalorder %s189, %s191
      %p195 = scmp.eq.s32.totalorder %s24, 0
      %p196 = por %p194, %p195
      %p197 = scmp.ne.s32.totalorder %s189, %s191
      %p198 = scmp.eq.s32.totalorder %s29, 1
      %p199 = por %p197, %p198
      %p200 = scmp.ne.s32.totalorder %s191, %s192
      %p201 = scmp.eq.s32.totalorder %s29, 0
      %p202 = por %p200, %p201
      %p203 = scmp.ne.s32.totalorder %s191, %s192
      %p204 = scmp.eq.s32.totalorder %s30, 1
      %p205 = por %p203, %p204
      %p207 = scmp.ne.s32.totalorder %s192, %s206
      %p208 = scmp.eq.s32.totalorder %s30, 0
      %p209 = por %p207, %p208
      %s211 = sadd.s32 %s210, 1
      %p214 = scmp.eq.s32.totalorder %s24, 1
      %p215 = scmp.ne.s32.totalorder %s210, %s212
      %p216 = scmp.eq.s32.totalorder %s24, 0
      %p217 = por %p215, %p216
      %p218 = scmp.ne.s32.totalorder %s210, %s212
      %p219 = scmp.eq.s32.totalorder %s29, 1
      %p220 = por %p218, %p219
      %p221 = scmp.ne.s32.totalorder %s212, %s213
      %p222 = scmp.eq.s32.totalorder %s29, 0
      %p223 = por %p221, %p222
      %p224 = scmp.ne.s32.totalorder %s212, %s213
      %p225 = scmp.eq.s32.totalorder %s30, 1
      %p226 = por %p224, %p225
      %p228 = scmp.ne.s32.totalorder %s213, %s227
      %p229 = scmp.eq.s32.totalorder %s30, 0
      %p230 = por %p228, %p229
      %s232 = sadd.s32 %s231, 1
      %p235 = scmp.eq.s32.totalorder %s24, 1
      %p236 = scmp.ne.s32.totalorder %s231, %s233
      %p237 = scmp.eq.s32.totalorder %s24, 0
      %p238 = por %p236, %p237
      %p239 = scmp.ne.s32.totalorder %s231, %s233
      %p240 = scmp.eq.s32.totalorder %s29, 1
      %p241 = por %p239, %p240
      %p242 = scmp.ne.s32.totalorder %s233, %s234
      %p243 = scmp.eq.s32.totalorder %s29, 0
      %p244 = por %p242, %p243
      %p245 = scmp.ne.s32.totalorder %s233, %s234
      %p246 = scmp.eq.s32.totalorder %s30, 1
      %p247 = por %p245, %p246
      %p249 = scmp.ne.s32.totalorder %s234, %s248
      %p250 = scmp.eq.s32.totalorder %s30, 0
      %p251 = por %p249, %p250
      %s253 = sadd.s32 %s252, 1
      %p256 = scmp.eq.s32.totalorder %s24, 1
      %p257 = scmp.ne.s32.totalorder %s252, %s254
      %p258 = scmp.eq.s32.totalorder %s24, 0
      %p259 = por %p257, %p258
      %p260 = scmp.ne.s32.totalorder %s252, %s254
      %p261 = scmp.eq.s32.totalorder %s29, 1
      %p262 = por %p260, %p261
      %p263 = scmp.ne.s32.totalorder %s254, %s255
      %p264 = scmp.eq.s32.totalorder %s29, 0
      %p265 = por %p263, %p264
      %p266 = scmp.ne.s32.totalorder %s254, %s255
      %p267 = scmp.eq.s32.totalorder %s30, 1
      %p268 = por %p266, %p267
      %p270 = scmp.ne.s32.totalorder %s255, %s269
      %p271 = scmp.eq.s32.totalorder %s30, 0
      %p272 = por %p270, %p271
      %s274 = sadd.s32 %s273, 1
      %p277 = scmp.eq.s32.totalorder %s24, 1
      %p278 = scmp.ne.s32.totalorder %s273, %s275
      %p279 = scmp.eq.s32.totalorder %s24, 0
      %p280 = por %p278, %p279
      %p281 = scmp.ne.s32.totalorder %s273, %s275
      %p282 = scmp.eq.s32.totalorder %s29, 1
      %p283 = por %p281, %p282
      %p284 = scmp.ne.s32.totalorder %s275, %s276
      %p285 = scmp.eq.s32.totalorder %s29, 0
      %p286 = por %p284, %p285
      %p287 = scmp.ne.s32.totalorder %s275, %s276
      %p288 = scmp.eq.s32.totalorder %s30, 1
      %p289 = por %p287, %p288
      %p291 = scmp.ne.s32.totalorder %s276, %s290
      %p292 = scmp.eq.s32.totalorder %s30, 0
      %p293 = por %p291, %p292
      %s295 = sadd.s32 %s294, 1
      %p298 = scmp.eq.s32.totalorder %s24, 1
      %p299 = scmp.ne.s32.totalorder %s294, %s296
      %p300 = scmp.eq.s32.totalorder %s24, 0
      %p301 = por %p299, %p300
      %p302 = scmp.ne.s32.totalorder %s294, %s296
      %p303 = scmp.eq.s32.totalorder %s29, 1
      %p304 = por %p302, %p303
      %p305 = scmp.ne.s32.totalorder %s296, %s297
      %p306 = scmp.eq.s32.totalorder %s29, 0
      %p307 = por %p305, %p306
      %p308 = scmp.ne.s32.totalorder %s296, %s297
      %p309 = scmp.eq.s32.totalorder %s30, 1
      %p310 = por %p308, %p309
      %p312 = scmp.ne.s32.totalorder %s297, %s311
      %p313 = scmp.eq.s32.totalorder %s30, 0
      %p314 = por %p312, %p313
      %s316 = sadd.s32 %s315, 1
      %p319 = scmp.eq.s32.totalorder %s24, 1
      %p320 = scmp.ne.s32.totalorder %s315, %s317
      %p321 = scmp.eq.s32.totalorder %s24, 0
      %p322 = por %p320, %p321
      %p323 = scmp.ne.s32.totalorder %s315, %s317
      %p324 = scmp.eq.s32.totalorder %s29, 1
      %p325 = por %p323, %p324
      %p326 = scmp.ne.s32.totalorder %s317, %s318
      %p327 = scmp.eq.s32.totalorder %s29, 0
      %p328 = por %p326, %p327
      %p329 = scmp.ne.s32.totalorder %s317, %s318
      %p330 = scmp.eq.s32.totalorder %s30, 1
      %p331 = por %p329, %p330
      %p333 = scmp.ne.s32.totalorder %s318, %s332
      %p334 = scmp.eq.s32.totalorder %s30, 0
      %p335 = por %p333, %p334
      %s336 = ssub.s32 %s24, %s31
      %p337 = scmp.eq.s32.totalorder %s336, 0
      %s339 = sadd.s32 %s338, 1
      %s340 = scalar_select %p337, %s338, %s339
      %p343 = pneg %p337
      %p344 = scmp.eq.s32.totalorder %s24, 1
      %p345 = por %p343, %p344
      %p346 = scmp.ne.s32.totalorder %s338, %s341
      %p347 = scmp.eq.s32.totalorder %s24, 0
      %p348 = por %p346, %p347
      %p349 = scmp.ne.s32.totalorder %s338, %s341
      %p350 = scmp.eq.s32.totalorder %s29, 1
      %p351 = por %p349, %p350
      %p352 = scmp.ne.s32.totalorder %s341, %s342
      %p353 = scmp.eq.s32.totalorder %s29, 0
      %p354 = por %p352, %p353
      %p355 = scmp.ne.s32.totalorder %s341, %s342
      %p356 = scmp.eq.s32.totalorder %s30, 1
      %p357 = por %p355, %p356
      %p359 = scmp.ne.s32.totalorder %s342, %s358
      %p360 = scmp.eq.s32.totalorder %s30, 0
      %p361 = por %p359, %p360
      %p362 = scmp.le.s32.totalorder 1, %s24
      %p363 = scmp.lt.s32.totalorder %s24, 3
      %p364 = pnand %p362, %p363
      %p365 = pneg %p364
      // Predicated region
      $region9: #{tpu_custom_call.1} parent=5 // pred_check
        _
      $region10: #{tpu_custom_call.1} parent=5 // pred_check_branch
        %367 = sbr.rel (%p364) target = $region12
      $region11: #{tpu_custom_call.1} parent=5 // pred_region
        %s368 = ssub.s32 %s24, 1
        // Predicated region
        $region13: #{tpu_custom_call.1} parent=11 // pred_check
          %p369 = pneg %p97
        $region14: #{tpu_custom_call.1} parent=11 // pred_check_branch
          %371 = sbr.rel (%p369) target = $region16
        $region15: #{tpu_custom_call.1} parent=11 // pred_region
          %373 = vsyncadd [#allocation4], 0
          %s375 = sshll.u32 %s2, 4
          %s376 = int_to_ptr.vmem [resolvable:$true] %s375
          %378 = dma.vmem_to_smem %s376, 16, [#allocation2], [#allocation4]
        $region16: #{tpu_custom_call.1} parent=11 // pred_fallthru
          _
        // Predicated region
        $region17: #{tpu_custom_call.1} parent=11 // pred_check
          %p379 = pneg %p118
        $region18: #{tpu_custom_call.1} parent=11 // pred_check_branch
          %381 = sbr.rel (%p379) target = $region20
        $region19: #{tpu_custom_call.1} parent=11 // pred_region
          _
        $region20: #{tpu_custom_call.1} parent=11 // pred_fallthru
          _
        // Predicated region
        $region21: #{tpu_custom_call.1} parent=11 // pred_check
          %p382 = pneg %p139
        $region22: #{tpu_custom_call.1} parent=11 // pred_check_branch
          %384 = sbr.rel (%p382) target = $region24
        $region23: #{tpu_custom_call.1} parent=11 // pred_region
          _
        $region24: #{tpu_custom_call.1} parent=11 // pred_fallthru
          _
        // Predicated region
        $region25: #{tpu_custom_call.1} parent=11 // pred_check
          %p385 = pneg %p160
        $region26: #{tpu_custom_call.1} parent=11 // pred_check_branch
          %387 = sbr.rel (%p385) target = $region28
        $region27: #{tpu_custom_call.1} parent=11 // pred_region
          _
        $region28: #{tpu_custom_call.1} parent=11 // pred_fallthru
          _
        // Predicated region
        $region29: #{tpu_custom_call.1} parent=11 // pred_check
          %p388 = pneg %p181
        $region30: #{tpu_custom_call.1} parent=11 // pred_check_branch
          %390 = sbr.rel (%p388) target = $region32
        $region31: #{tpu_custom_call.1} parent=11 // pred_region
          _
        $region32: #{tpu_custom_call.1} parent=11 // pred_fallthru
          _
        // Predicated region
        $region33: #{tpu_custom_call.1} parent=11 // pred_check
          %p391 = pneg %p202
        $region34: #{tpu_custom_call.1} parent=11 // pred_check_branch
          %393 = sbr.rel (%p391) target = $region36
        $region35: #{tpu_custom_call.1} parent=11 // pred_region
          _
        $region36: #{tpu_custom_call.1} parent=11 // pred_fallthru
          _
        // Predicated region
        $region37: #{tpu_custom_call.1} parent=11 // pred_check
          %p394 = pneg %p223
        $region38: #{tpu_custom_call.1} parent=11 // pred_check_branch
          %396 = sbr.rel (%p394) target = $region40
        $region39: #{tpu_custom_call.1} parent=11 // pred_region
          _
        $region40: #{tpu_custom_call.1} parent=11 // pred_fallthru
          _
        // Predicated region
        $region41: #{tpu_custom_call.1} parent=11 // pred_check
          %p397 = pneg %p244
        $region42: #{tpu_custom_call.1} parent=11 // pred_check_branch
          %399 = sbr.rel (%p397) target = $region44
        $region43: #{tpu_custom_call.1} parent=11 // pred_region
          _
        $region44: #{tpu_custom_call.1} parent=11 // pred_fallthru
          _
        // Predicated region
        $region45: #{tpu_custom_call.1} parent=11 // pred_check
          %p400 = pneg %p265
        $region46: #{tpu_custom_call.1} parent=11 // pred_check_branch
          %402 = sbr.rel (%p400) target = $region48
        $region47: #{tpu_custom_call.1} parent=11 // pred_region
          _
        $region48: #{tpu_custom_call.1} parent=11 // pred_fallthru
          _
        // Predicated region
        $region49: #{tpu_custom_call.1} parent=11 // pred_check
          %p403 = pneg %p286
        $region50: #{tpu_custom_call.1} parent=11 // pred_check_branch
          %405 = sbr.rel (%p403) target = $region52
        $region51: #{tpu_custom_call.1} parent=11 // pred_region
          _
        $region52: #{tpu_custom_call.1} parent=11 // pred_fallthru
          _
        // Predicated region
        $region53: #{tpu_custom_call.1} parent=11 // pred_check
          %p406 = pneg %p307
        $region54: #{tpu_custom_call.1} parent=11 // pred_check_branch
          %408 = sbr.rel (%p406) target = $region56
        $region55: #{tpu_custom_call.1} parent=11 // pred_region
          _
        $region56: #{tpu_custom_call.1} parent=11 // pred_fallthru
          _
        // Predicated region
        $region57: #{tpu_custom_call.1} parent=11 // pred_check
          %p409 = pneg %p328
        $region58: #{tpu_custom_call.1} parent=11 // pred_check_branch
          %411 = sbr.rel (%p409) target = $region60
        $region59: #{tpu_custom_call.1} parent=11 // pred_region
          _
        $region60: #{tpu_custom_call.1} parent=11 // pred_fallthru
          _
      $region12: #{tpu_custom_call.1} parent=5 // pred_fallthru
        _
      %p412 = scmp.lt.s32.totalorder %s24, 2
      // Predicated region
      $region61: #{tpu_custom_call.1} parent=5 // pred_check
        %p413 = pneg %p412
      $region62: #{tpu_custom_call.1} parent=5 // pred_check_branch
        %415 = sbr.rel (%p413) target = $region64
      $region63: #{tpu_custom_call.1} parent=5 // pred_region
        // Predicated region
        $region65: #{tpu_custom_call.1} parent=63 // pred_check
          %p416 = pneg %p44
        $region66: #{tpu_custom_call.1} parent=63 // pred_check_branch
          %418 = sbr.rel (%p416) target = $region68
        $region67: #{tpu_custom_call.1} parent=63 // pred_region
          %p419 = scmp.lt.s32.totalorder %s24, 1
          %s420 = scalar_select %p419, %s24, 1
          %s421 = smul.addr %s420, 2
          %s422 = smul.addr %s421, 8
          %s423 = scalar_lea.vmem %s0, %s422
        $region68: #{tpu_custom_call.1} parent=63 // pred_fallthru
          _
        // Predicated region
        $region69: #{tpu_custom_call.1} parent=63 // pred_check
          %p424 = pneg %p70
        $region70: #{tpu_custom_call.1} parent=63 // pred_check_branch
          %426 = sbr.rel (%p424) target = $region72
        $region71: #{tpu_custom_call.1} parent=63 // pred_region
          %p427 = scmp.lt.s32.totalorder %s24, 1
          %s428 = scalar_select %p427, %s24, 1
          %s429 = smul.addr %s428, 2
          %s430 = smul.addr %s429, 4
          %s431 = scalar_lea.vmem %s1, %s430
        $region72: #{tpu_custom_call.1} parent=63 // pred_fallthru
          _
      $region64: #{tpu_custom_call.1} parent=5 // pred_fallthru
        _
      %p432 = scmp.le.s32.totalorder 1, %s24
      %p433 = scmp.lt.s32.totalorder %s24, 3
      %p434 = pnand %p432, %p433
      %p435 = pneg %p434
      // Predicated region
      $region73: #{tpu_custom_call.1} parent=5 // pred_check
        _
      $region74: #{tpu_custom_call.1} parent=5 // pred_check_branch
        %437 = sbr.rel (%p434) target = $region76
      $region75: #{tpu_custom_call.1} parent=5 // pred_region
        %s438 = ssub.s32 %s24, 1
        // Predicated region
        $region77: #{tpu_custom_call.1} parent=75 // pred_check
          %p439 = pneg %p97
        $region78: #{tpu_custom_call.1} parent=75 // pred_check_branch
          %441 = sbr.rel (%p439) target = $region80
        $region79: #{tpu_custom_call.1} parent=75 // pred_region
          %443 = dma.done [#allocation4], 16
        $region80: #{tpu_custom_call.1} parent=75 // pred_fallthru
          _
        %444 = sfence
        %p445 = scmp.lt.s32.totalorder %s29, 1
        %s446 = scalar_select %p445, %s29, 1
        %s447 = smul.addr %s446, 2
        %s448 = smul.addr %s447, 8
        %s449 = scalar_lea.vmem %s0, %s448
        %p450 = pneg %p50
        %p451 = pneg %p47
        %p452 = scmp.lt.s32.totalorder %s29, 1
        %s453 = scalar_select %p452, %s29, 1
        %s454 = smul.addr %s453, 2
        %s455 = smul.addr %s454, 4
        %s456 = scalar_lea.vmem %s1, %s455
        %p457 = pneg %p76
        %p458 = pneg %p73
        %p459 = pneg %p97
        %p460 = pneg %p94
        %p461 = pneg %p118
        %p462 = pneg %p115
        %p463 = pneg %p139
        %p464 = pneg %p136
        %p465 = pneg %p160
        %p466 = pneg %p157
        %p467 = pneg %p181
        %p468 = pneg %p178
        %p469 = pneg %p202
        %p470 = pneg %p199
        %p471 = pneg %p223
        %p472 = pneg %p220
        %p473 = pneg %p244
        %p474 = pneg %p241
        %p475 = pneg %p265
        %p476 = pneg %p262
        %p477 = pneg %p286
        %p478 = pneg %p283
        %p479 = pneg %p307
        %p480 = pneg %p304
        %p481 = pneg %p328
        %p482 = pneg %p325
        %p483 = pneg %p354
        %p484 = pneg %p351
        %s485 = sand.u32 %s341, 1
        %s486 = scalar_lea.sflag [#allocation3], %s485
        %s487 = sand.u32 %s341, 1
        %s488 = smul.addr %s487, 4
        %s489 = scalar_lea.vmem [#allocation5], %s488
        %p490 = scmp.lt.s32.totalorder %s29, 1
        %s491 = scalar_select %p490, %s29, 1
        %s492 = smul.addr %s491, 2
        %s493 = smul.addr %s492, 8
        %s494 = scalar_lea.vmem %s0, %s493
        %p495 = scmp.lt.s32.totalorder %s29, 1
        %s496 = scalar_select %p495, %s29, 1
        %s497 = smul.addr %s496, 2
        %s498 = smul.addr %s497, 4
        %s499 = scalar_lea.vmem %s1, %s498
        %v501 = vld [vmem:[%s499] sm:$0xf]
        %v502 = vld [vmem:[%s499 + $0x4] sm:$0xf]
        %v503 = vld [vmem:[%s494] sm:$0xff]
        %v504 = vld [vmem:[%s494 + $0x8] sm:$0xff]
        %s505 = sld [smem:[#allocation2]]
        %v506 = vpack.c.bf16 %v504, %v503
        %v509 = vunpack.c.l.b16 %v501
        %v510 = vunpack.c.l.b16 %v502
        %v511 = vpack.c.b16 %v510, %v509
        %vm512 = vcmask 130048
        %v514 = vsel %vm512, %v511, 0
        %516 = vmatpush.bf16.msra.mxu0 0
        %517 = vmatpush.bf16.msra.mxu0 0
        %518 = vmatpush.bf16.msra.mxu0 0
        %519 = vmatpush.bf16.msra.mxu0 0
        %520 = vmatpush.bf16.msra.mxu0 0
        %521 = vmatpush.bf16.msra.mxu0 0
        %522 = vmatpush.bf16.msra.mxu0 0
        %523 = vmatpush.bf16.msra.mxu0 %v506
        %524 = vmatmul.bf16.gmra.mxu0 %v514
        %v525 = vpop.f32.mrf.mxu0
        %v526 = vadd.f32 0.0, %v525
        %v527 = vpop.f32.mrf.mxu0
        %v528 = vadd.f32 0.0, %v527
        %529 = vdwg.mxu0
        %s530 = sadd.f32 %s505, 1.0
        %v531 = vstv %s530
        %v532 = vmul.f32 %v531, %v503
        %v533 = vmul.f32 %v531, %v504
        %v534 = vadd.f32 %v532, %v526
        %v535 = vadd.f32 %v533, %v528
        %v536 = vpack.c.bf16 %v535, %v534
        %v537 = vld [vmem:[%s3] sm:$0xf]
        %v538 = vld [vmem:[%s4] sm:$0x1]
        %v540 = vperm.slane %v538, 0
        %vm542 = vcmask 64512
        %v544 = vsel %vm542, %v536, 0
        %vm546 = vcmask 1043456
        %v548 = vsel %vm546, %v537, 0
        %550 = vmatpush.bf16.msra.mxu0 0
        %551 = vmatpush.bf16.msra.mxu0 0
        %552 = vmatpush.bf16.msra.mxu0 0
        %553 = vmatpush.bf16.msra.mxu0 0
        %554 = vmatpush.bf16.msra.mxu0 0
        %555 = vmatpush.bf16.msra.mxu0 0
        %556 = vmatpush.bf16.msra.mxu0 0
        %557 = vmatpush.bf16.msra.mxu0 %v548
        %558 = vmatmul.bf16.gmra.mxu0 %v544
        %v559 = vpop.f32.mrf.mxu0
        %v560 = vadd.f32 %v540, %v559
        %v561 = vpop.f32.mrf.mxu0
        %v562 = vadd.f32 %v540, %v561
        %563 = vdwg.mxu0
        %v564 = vmax.f32 %v560, 0.0
        %v565 = vmax.f32 %v562, 0.0
        %v566 = vpack.c.bf16 %v565, %v564
        %v567 = vld [vmem:[%s5] sm:$0xf]
        %v568 = vld [vmem:[%s5 + $0x4] sm:$0xf]
        %v569 = vld [vmem:[%s5 + $0x8] sm:$0xf]
        %v570 = vld [vmem:[%s5 + $0xc] sm:$0xf]
        %v571 = vld [vmem:[%s6] sm:$0x1]
        %v573 = vperm.slane %v571, 0
        %v579 = vunpack.c.l.b16 %v567
        %v580 = vunpack.c.l.b16 %v568
        %v581 = vunpack.c.l.b16 %v569
        %v582 = vunpack.c.l.b16 %v570
        %v583 = vpack.c.b16 %v580, %v579
        %v584 = vpack.c.b16 %v582, %v581
        %vm587 = vcmask 261120
        %v589 = vsel %vm587, %v566, 0
        %591 = vmatpush.bf16.msra.mxu0 0
        %592 = vmatpush.bf16.msra.mxu0 0
        %593 = vmatpush.bf16.msra.mxu0 0
        %594 = vmatpush.bf16.msra.mxu0 0
        %595 = vmatpush.bf16.msra.mxu0 0
        %596 = vmatpush.bf16.msra.mxu0 0
        %597 = vmatpush.bf16.msra.mxu0 %v584
        %598 = vmatpush.bf16.msra.mxu0 %v583
        %599 = vmatmul.bf16.gmra.mxu0 %v589
        %v600 = vpop.f32.mrf.mxu0
        %v601 = vadd.f32 %v573, %v600
        %v602 = vpop.f32.mrf.mxu0
        %v603 = vadd.f32 %v573, %v602
        %604 = vdwg.mxu0
        %v605 = vsel %vm542, %v601, -inf
        %v606 = vsel %vm542, %v603, -inf
        %v607 = vmax.f32 %v605, %v606
        %v608 = vrot.slane %v607, 4
        %v609 = vmax.f32 %v607, %v608
        %v610 = vrot.slane %v609, 2
        %v611 = vmax.f32 %v609, %v610
        %v612 = vrot.slane %v611, 1
        %v613 = vmax.f32 %v611, %v612
        %v614 = vsub.f32 %v601, %v613
        %v615 = vsub.f32 %v603, %v613
        %v616 = vmul.f32 %v614, 1.442695
        %v617 = vpow.pop %v616
        %v618 = vmul.f32 %v615, 1.442695
        %v619 = vpow.pop %v618
        %v620 = vsel %vm542, %v617, 0.0
        %v621 = vsel %vm542, %v619, 0.0
        %v622 = vadd.f32 %v620, %v621
        %v623 = vrot.slane %v622, 4
        %v624 = vadd.f32 %v622, %v623
        %v625 = vrot.slane %v624, 2
        %v626 = vadd.f32 %v624, %v625
        %v627 = vrot.slane %v626, 1
        %v628 = vadd.f32 %v626, %v627
        %v629 = vrcp.pop %v628
        %v630 = vmul.f32 %v628, %v629
        %v631 = vsub.f32 1.0, %v630
        %v632 = vmul.f32 %v629, %v631
        %v633 = vadd.f32 %v629, %v632
        %vm634 = vweird.f32 %v628
        %vm635 = vweird.f32 %v629
        %vm636 = vmor %vm634, %vm635
        %v637 = vsel %vm636, %v629, %v633
        %v638 = vand.u32 2147483647, %v628
        %vm639 = vcmp.eq.f32.partialorder %v638, 8.507059e+37
        %v640 = vand.u32 %v628, 2147483648
        %v641 = vor.u32 1.1754944e-38, %v640
        %v642 = vsel %vm639, %v641, %v637
        %v643 = vmul.f32 %v617, %v642
        %v644 = vmul.f32 %v619, %v642
        %v645 = vpack.c.bf16 %v644, %v643
        %646 = vxpose.xlu0.c.b16.start [1/8] %v566, 128
        %647 = vxpose.xlu0.c.b16.cont [2/8] 0, 128
        %648 = vxpose.xlu0.c.b16.cont [3/8] 0, 128
        %649 = vxpose.xlu0.c.b16.cont [4/8] 0, 128
        %650 = vxpose.xlu0.c.b16.cont [5/8] 0, 128
        %651 = vxpose.xlu0.c.b16.cont [6/8] 0, 128
        %652 = vxpose.xlu0.c.b16.cont [7/8] 0, 128
        %653 = vxpose.xlu0.c.b16.end [8/8] 0, 128
        %v654 = vpop.trf.xlu0
        %v655 = vpop.trf.xlu0
        %v656 = vpop.trf.xlu0
        %v657 = vpop.trf.xlu0
        %v658 = vpop.trf.xlu0
        %v659 = vpop.trf.xlu0
        %v660 = vpop.trf.xlu0
        %v661 = vpop.trf.xlu0
        %v663 = vsel %vm512, %v654, 0
        %v666 = vsel %vm512, %v655, 0
        %668 = vmatpush.bf16.msra.mxu0 0
        %669 = vmatpush.bf16.msra.mxu0 0
        %670 = vmatpush.bf16.msra.mxu0 0
        %671 = vmatpush.bf16.msra.mxu0 0
        %672 = vmatpush.bf16.msra.mxu0 0
        %673 = vmatpush.bf16.msra.mxu0 0
        %674 = vmatpush.bf16.msra.mxu0 0
        %675 = vmatpush.bf16.msra.mxu0 %v645
        %676 = vmatmul.bf16.gmra.mxu0 %v663
        %v677 = vpop.f32.mrf.mxu0
        %v678 = vadd.f32 0.0, %v677
        %v679 = vpop.f32.mrf.mxu0
        %v680 = vadd.f32 0.0, %v679
        %681 = vmatmul.bf16.gmra.mxu0 %v666
        %v682 = vpop.f32.mrf.mxu0
        %v683 = vadd.f32 0.0, %v682
        %v684 = vpop.f32.mrf.mxu0
        %v685 = vadd.f32 0.0, %v684
        %686 = vdwg.mxu0
        %v687 = vld [vmem:[%s7] sm:$0x3]
        %v688 = vpack.c.bf16 %v680, %v678
        %v689 = vpack.c.bf16 %v685, %v683
        %s690 = sld [smem:[#allocation2 + $0x1]]
        %691 = vmatpush.bf16.msra.mxu0 0
        %692 = vmatpush.bf16.msra.mxu0 0
        %693 = vmatpush.bf16.msra.mxu0 0
        %694 = vmatpush.bf16.msra.mxu0 0
        %695 = vmatpush.bf16.msra.mxu0 0
        %696 = vmatpush.bf16.msra.mxu0 0
        %697 = vmatpush.bf16.msra.mxu0 0
        %698 = vmatpush.bf16.msra.mxu0 %v566
        %699 = vmatmul.bf16.gmra.mxu0 %v514
        %v700 = vpop.f32.mrf.mxu0
        %v701 = vadd.f32 0.0, %v700
        %v702 = vpop.f32.mrf.mxu0
        %v703 = vadd.f32 0.0, %v702
        %704 = vdwg.mxu0
        %s705 = sadd.f32 %s690, 1.0
        %v706 = vstv %s705
        %v707 = vmul.f32 %v706, %v564
        %v708 = vmul.f32 %v706, %v565
        %v709 = vadd.f32 %v707, %v701
        %v710 = vadd.f32 %v708, %v703
        %v711 = vpack.c.bf16 %v710, %v709
        %v712 = vld [vmem:[%s8] sm:$0xf]
        %v713 = vld [vmem:[%s8 + $0x4] sm:$0xf]
        %v714 = vld [vmem:[%s8 + $0x8] sm:$0xf]
        %v715 = vld [vmem:[%s8 + $0xc] sm:$0xf]
        %v716 = vld [vmem:[%s9] sm:$0x1]
        %v718 = vperm.slane %v716, 0
        %v724 = vunpack.c.l.b16 %v712
        %v725 = vunpack.c.l.b16 %v713
        %v726 = vunpack.c.l.b16 %v714
        %v727 = vunpack.c.l.b16 %v715
        %v728 = vpack.c.b16 %v725, %v724
        %v729 = vpack.c.b16 %v727, %v726
        %v733 = vsel %vm587, %v711, 0
        %735 = vmatpush.bf16.msra.mxu0 0
        %736 = vmatpush.bf16.msra.mxu0 0
        %737 = vmatpush.bf16.msra.mxu0 0
        %738 = vmatpush.bf16.msra.mxu0 0
        %739 = vmatpush.bf16.msra.mxu0 0
        %740 = vmatpush.bf16.msra.mxu0 0
        %741 = vmatpush.bf16.msra.mxu0 %v729
        %742 = vmatpush.bf16.msra.mxu0 %v728
        %743 = vmatmul.bf16.gmra.mxu0 %v733
        %v744 = vpop.f32.mrf.mxu0
        %v745 = vadd.f32 %v718, %v744
        %v746 = vpop.f32.mrf.mxu0
        %v747 = vadd.f32 %v718, %v746
        %748 = vdwg.mxu0
        %v749 = vmax.f32 %v745, 0.0
        %v750 = vmax.f32 %v747, 0.0
        %v751 = vpack.c.bf16 %v750, %v749
        %v752 = vld [vmem:[%s10] sm:$0xf]
        %v753 = vld [vmem:[%s10 + $0x4] sm:$0xf]
        %v754 = vld [vmem:[%s10 + $0x8] sm:$0xf]
        %v755 = vld [vmem:[%s10 + $0xc] sm:$0xf]
        %v756 = vld [vmem:[%s11] sm:$0x1]
        %v758 = vperm.slane %v756, 0
        %v764 = vunpack.c.l.b16 %v752
        %v765 = vunpack.c.l.b16 %v753
        %v766 = vunpack.c.l.b16 %v754
        %v767 = vunpack.c.l.b16 %v755
        %v768 = vpack.c.b16 %v765, %v764
        %v769 = vpack.c.b16 %v767, %v766
        %v773 = vsel %vm587, %v751, 0
        %775 = vmatpush.bf16.msra.mxu0 0
        %776 = vmatpush.bf16.msra.mxu0 0
        %777 = vmatpush.bf16.msra.mxu0 0
        %778 = vmatpush.bf16.msra.mxu0 0
        %779 = vmatpush.bf16.msra.mxu0 0
        %780 = vmatpush.bf16.msra.mxu0 0
        %781 = vmatpush.bf16.msra.mxu0 %v769
        %782 = vmatpush.bf16.msra.mxu0 %v768
        %783 = vmatmul.bf16.gmra.mxu0 %v773
        %v784 = vpop.f32.mrf.mxu0
        %v785 = vadd.f32 %v758, %v784
        %v786 = vpop.f32.mrf.mxu0
        %v787 = vadd.f32 %v758, %v786
        %788 = vdwg.mxu0
        %v789 = vsel %vm542, %v785, -inf
        %v790 = vsel %vm542, %v787, -inf
        %v791 = vmax.f32 %v789, %v790
        %v792 = vrot.slane %v791, 4
        %v793 = vmax.f32 %v791, %v792
        %v794 = vrot.slane %v793, 2
        %v795 = vmax.f32 %v793, %v794
        %v796 = vrot.slane %v795, 1
        %v797 = vmax.f32 %v795, %v796
        %v798 = vsub.f32 %v785, %v797
        %v799 = vsub.f32 %v787, %v797
        %v800 = vmul.f32 %v798, 1.442695
        %v801 = vpow.pop %v800
        %v802 = vmul.f32 %v799, 1.442695
        %v803 = vpow.pop %v802
        %v804 = vsel %vm542, %v801, 0.0
        %v805 = vsel %vm542, %v803, 0.0
        %v806 = vadd.f32 %v804, %v805
        %v807 = vrot.slane %v806, 4
        %v808 = vadd.f32 %v806, %v807
        %v809 = vrot.slane %v808, 2
        %v810 = vadd.f32 %v808, %v809
        %v811 = vrot.slane %v810, 1
        %v812 = vadd.f32 %v810, %v811
        %v813 = vrcp.pop %v812
        %v814 = vmul.f32 %v812, %v813
        %v815 = vsub.f32 1.0, %v814
        %v816 = vmul.f32 %v813, %v815
        %v817 = vadd.f32 %v813, %v816
        %vm818 = vweird.f32 %v812
        %vm819 = vweird.f32 %v813
        %vm820 = vmor %vm818, %vm819
        %v821 = vsel %vm820, %v813, %v817
        %v822 = vand.u32 2147483647, %v812
        %vm823 = vcmp.eq.f32.partialorder %v822, 8.507059e+37
        %v824 = vand.u32 %v812, 2147483648
        %v825 = vor.u32 1.1754944e-38, %v824
        %v826 = vsel %vm823, %v825, %v821
        %v827 = vmul.f32 %v801, %v826
        %v828 = vmul.f32 %v803, %v826
        %v829 = vpack.c.bf16 %v828, %v827
        %830 = vxpose.xlu0.c.b16.start [1/8] %v751, 128
        %831 = vxpose.xlu0.c.b16.cont [2/8] 0, 128
        %832 = vxpose.xlu0.c.b16.cont [3/8] 0, 128
        %833 = vxpose.xlu0.c.b16.cont [4/8] 0, 128
        %834 = vxpose.xlu0.c.b16.cont [5/8] 0, 128
        %835 = vxpose.xlu0.c.b16.cont [6/8] 0, 128
        %836 = vxpose.xlu0.c.b16.cont [7/8] 0, 128
        %837 = vxpose.xlu0.c.b16.end [8/8] 0, 128
        %v838 = vpop.trf.xlu0
        %v839 = vpop.trf.xlu0
        %v840 = vpop.trf.xlu0
        %v841 = vpop.trf.xlu0
        %v842 = vpop.trf.xlu0
        %v843 = vpop.trf.xlu0
        %v844 = vpop.trf.xlu0
        %v845 = vpop.trf.xlu0
        %v847 = vsel %vm512, %v838, 0
        %v850 = vsel %vm512, %v839, 0
        %852 = vmatpush.bf16.msra.mxu0 0
        %853 = vmatpush.bf16.msra.mxu0 0
        %854 = vmatpush.bf16.msra.mxu0 0
        %855 = vmatpush.bf16.msra.mxu0 0
        %856 = vmatpush.bf16.msra.mxu0 0
        %857 = vmatpush.bf16.msra.mxu0 0
        %858 = vmatpush.bf16.msra.mxu0 0
        %859 = vmatpush.bf16.msra.mxu0 %v829
        %860 = vmatmul.bf16.gmra.mxu0 %v847
        %v861 = vpop.f32.mrf.mxu0
        %v862 = vadd.f32 0.0, %v861
        %v863 = vpop.f32.mrf.mxu0
        %v864 = vadd.f32 0.0, %v863
        %865 = vmatmul.bf16.gmra.mxu0 %v850
        %v866 = vpop.f32.mrf.mxu0
        %v867 = vadd.f32 0.0, %v866
        %v868 = vpop.f32.mrf.mxu0
        %v869 = vadd.f32 0.0, %v868
        %870 = vdwg.mxu0
        %v871 = vld [vmem:[%s12] sm:$0x3]
        %v872 = vpack.c.bf16 %v864, %v862
        %v873 = vpack.c.bf16 %v869, %v867
        %v875 = vsel %vm587, %v871, 0
        %877 = vmatpush.bf16.msra.mxu0 0
        %878 = vmatpush.bf16.msra.mxu0 0
        %879 = vmatpush.bf16.msra.mxu0 0
        %880 = vmatpush.bf16.msra.mxu0 0
        %881 = vmatpush.bf16.msra.mxu0 0
        %882 = vmatpush.bf16.msra.mxu0 0
        %883 = vmatpush.bf16.msra.mxu0 %v873
        %884 = vmatpush.bf16.msra.mxu0 %v872
        %885 = vmatmul.bf16.gmra.mxu0 %v875
        %v886 = vpop.f32.mrf.mxu0
        %v887 = vadd.f32 0.0, %v886
        %v888 = vpop.f32.mrf.mxu0
        %889 = vdwg.mxu0
        %v891 = vsel %vm587, %v687, 0
        %893 = vmatpush.bf16.msra.mxu0 0
        %894 = vmatpush.bf16.msra.mxu0 0
        %895 = vmatpush.bf16.msra.mxu0 0
        %896 = vmatpush.bf16.msra.mxu0 0
        %897 = vmatpush.bf16.msra.mxu0 0
        %898 = vmatpush.bf16.msra.mxu0 0
        %899 = vmatpush.bf16.msra.mxu0 %v689
        %900 = vmatpush.bf16.msra.mxu0 %v688
        %901 = vmatmul.bf16.gmra.mxu0 %v891
        %v902 = vpop.f32.mrf.mxu0
        %v903 = vadd.f32 %v887, %v902
        %v904 = vpop.f32.mrf.mxu0
        %905 = vdwg.mxu0
        %v906 = vld [vmem:[%s13] sm:$0xf]
        %908 = vset.pattern.permute.xlu0 0
        %909 = vperm.xlu0 %908, %v906
        %v910 = vpop.permute.xlu0 %909
        %v912 = vadd.f32 %v903, %v910
        %vm913 = vcmp.gt.f32.partialorder %v912, 0.0
        %v914 = vmul.f32 %v912, 0.01
        %v915 = vsel %vm913, %v912, %v914
        %vm916 = vcmask 60416
        %917 = vst.msk [vmem:[%s489] sm:$0xf] %vm916, %v915
        %s918 = sand.u32 %s341, 1
        %s919 = scalar_lea.sflag [#allocation3], %s918
        %s920 = sand.u32 %s341, 1
        %s921 = smul.addr %s920, 4
        %s922 = scalar_lea.vmem [#allocation5], %s921
        // Predicated region
        $region81: #{tpu_custom_call.1} parent=75 // pred_check
          %p923 = pneg %p351
        $region82: #{tpu_custom_call.1} parent=75 // pred_check_branch
          %925 = sbr.rel (%p923) target = $region84
        $region83: #{tpu_custom_call.1} parent=75 // pred_region
          %927 = vsyncadd %s919, 0
          %s928 = smul.addr %s29, 4
          %s929 = scalar_lea.hbm %s14, %s928
          %s931 = sshll.u32 %s922, 4
          %s932 = int_to_ptr.vmem [resolvable:$true] %s931
          %s933 = sshll.u32 %s929, 4
          %s934 = int_to_ptr.hbm [resolvable:$true] %s933
          %936 = dma.vmem_to_hbm [thread:$0]  %s932, 64, %s934, %s919
        $region84: #{tpu_custom_call.1} parent=75 // pred_fallthru
          _
      $region76: #{tpu_custom_call.1} parent=5 // pred_fallthru
        _
      %p937 = scmp.le.s32.totalorder 2, %s24
      // Predicated region
      $region85: #{tpu_custom_call.1} parent=5 // pred_check
        %p938 = pneg %p937
      $region86: #{tpu_custom_call.1} parent=5 // pred_check_branch
        %940 = sbr.rel (%p938) target = $region88
      $region87: #{tpu_custom_call.1} parent=5 // pred_region
        %s941 = ssub.s32 %s24, 2
        // Predicated region
        $region89: #{tpu_custom_call.1} parent=87 // pred_check
          %p942 = pneg %p357
        $region90: #{tpu_custom_call.1} parent=87 // pred_check_branch
          %944 = sbr.rel (%p942) target = $region92
        $region91: #{tpu_custom_call.1} parent=87 // pred_region
          %s945 = sand.u32 %s342, 1
          %s946 = scalar_lea.sflag [#allocation3], %s945
          %s947 = sand.u32 %s342, 1
          %s948 = smul.addr %s947, 4
          %s949 = scalar_lea.vmem [#allocation5], %s948
          %951 = dma.done %s946, 64
        $region92: #{tpu_custom_call.1} parent=87 // pred_fallthru
          _
      $region88: #{tpu_custom_call.1} parent=5 // pred_fallthru
        _
    $region6: #{tpu_custom_call.1} parent=1 // loop_footer
      %s28 = sadd.s32 1, %s24
    $region7: #{tpu_custom_call.1} parent=1 // loop_footer_branch
      %23 = sbr.rel target = $region3
    $region8: #{tpu_custom_call.1} parent=1 // loop_exit
      _
    %952 = vsyncpa [#allocation3], 1
    %s953 = scalar_lea.sflag [#allocation3], 1
    %954 = vsyncpa %s953, 1
    %955 = vsyncpa [#allocation4], 1
    %s956 = scalar_lea.sflag [#allocation4], 1
    %957 = vsyncpa %s956, 1

</llo_original>
